<compile_context>
chip_gen: v7x
topology: tpu7x:2x2x1
jax: 0.10.0
libtpu: 0.0.40
codegen_flags: <defaults>
</compile_context>

<pallas_src>
import numpy as np
import jax
import jax.numpy as jnp
from jax import lax
from jax.experimental import pallas as pl
from jax.experimental.pallas import tpu as pltpu

# ----------------------------- config (small shapes) -----------------------------
B = 2          # batch
T = 16         # sequence length (power of two -> cheap boundary masks)
C = 64         # n_feature
NCLS = 5       # n_class
NC2 = 2 * NCLS
K = 3          # conv kernel size (activity_net=False)
PAD = 1        # padding = (K-1)//2 * dilation
DIL = 1
GROUPS = 2
NEG_SLOPE = 0.2
BT = B * T
CLS_PAD = 128  # lane-dense fused output width (>= C + NC2, multiple of 128)

assert (T & (T - 1)) == 0, "boundary-mask fast path assumes T is a power of two"
assert C + NC2 <= CLS_PAD


def _leaky(v):
    return jnp.where(v > 0, v, NEG_SLOPE * v)


# ----------------------------- Pallas kernel -----------------------------
def model_kernel(x_ref, w1_ref, b1_ref, w2_ref, b2_ref, wf_ref, bf_ref, out_ref):
    # x_ref: (BT, C); w1/w2: (K, C, C) per-tap block-diagonal dense weights;
    # b1/b2: (1, C); wf: (C, CLS_PAD) [identity | classifier | zeros]; bf: (1, CLS_PAD).
    x = x_ref[...]  # (BT, C)

    # Hoisted batch/sequence-boundary masks (computed once, reused by both convs).
    rows = lax.broadcasted_iota(jnp.int32, (BT, 1), 0)
    t = rows & (T - 1)          # == rows % T (T is a power of two)
    mask_m1 = t >= PAD          # tap s=-1 valid (t-1 >= 0)
    mask_p1 = t < (T - PAD)     # tap s=+1 valid (t+1 <  T)

    def conv(xin, w_ref, b_ref):
        # roll shifts must be non-negative: roll by 1 gives x[r-1], roll by BT-1 gives x[r+1]
        x_m1 = jnp.where(mask_m1, pltpu.roll(xin, shift=1, axis=0), 0.0)       # x[t-1]
        x_p1 = jnp.where(mask_p1, pltpu.roll(xin, shift=BT - 1, axis=0), 0.0)  # x[t+1]
        # three accumulated K=64 contractions; tap order k=0 -> s=-1, k=1 -> s=0, k=2 -> s=+1
        y = jnp.dot(x_m1, w_ref[0], preferred_element_type=jnp.float32)
        y = y + jnp.dot(xin, w_ref[1], preferred_element_type=jnp.float32)
        y = y + jnp.dot(x_p1, w_ref[2], preferred_element_type=jnp.float32)
        return y + b_ref[...]

    # conv -> leaky relu -> residual, twice
    x1 = _leaky(conv(x, w1_ref, b1_ref)) + x
    x2 = _leaky(conv(x1, w2_ref, b2_ref)) + x1

    # Fused lane-dense output: lanes 0..C-1 = x2 (identity block), lanes C..C+NC2-1 = classifier.
    out = jnp.dot(x2, wf_ref[...], preferred_element_type=jnp.float32) + bf_ref[...]
    out_ref[...] = out.astype(out_ref.dtype)


def model_forward_pallas(inputs_btc, w1taps, b1, w2taps, b2, wf, bf):
    """inputs_btc: (B, T, C). w1taps/w2taps: (K, C, C); wf: (C, CLS_PAD); bf: (1, CLS_PAD)."""
    x_flat = inputs_btc.reshape(BT, C)  # free (contiguous) reshape

    out = pl.pallas_call(
        model_kernel,
        out_shape=jax.ShapeDtypeStruct((BT, CLS_PAD), jnp.float32),
        grid=(1,),
        in_specs=[
            pl.BlockSpec((BT, C), lambda i: (0, 0)),
            pl.BlockSpec((K, C, C), lambda i: (0, 0, 0)),
            pl.BlockSpec((1, C), lambda i: (0, 0)),
            pl.BlockSpec((K, C, C), lambda i: (0, 0, 0)),
            pl.BlockSpec((1, C), lambda i: (0, 0)),
            pl.BlockSpec((C, CLS_PAD), lambda i: (0, 0)),
            pl.BlockSpec((1, CLS_PAD), lambda i: (0, 0)),
        ],
        out_specs=pl.BlockSpec((BT, CLS_PAD), lambda i: (0, 0)),
        compiler_params=pltpu.CompilerParams(
            dimension_semantics=("arbitrary",)),
    )(x_flat, w1taps, b1.reshape(1, C), w2taps, b2.reshape(1, C), wf, bf)

    x_out = out[:, :C].reshape(B, T, C)
    cls = out[:, C:C + NC2].reshape(B, T, NC2)

    # Same tuple slicing as the PyTorch forward (eval path, no dropout).
    # Note: the 1024 split assumes the original n_feature=2048; with C=64 the
    # first slice is empty and the third returns all channels (same as PyTorch).
    return (x_out[:, :, 1024:], cls[:, :, NCLS:], x_out[:, :, :1024], cls[:, :, :NCLS])


# ----------------------------- parameter setup (glue, plain JAX/NumPy) -----------------------------
def make_params(key):
    # weights_init: Conv* layers ~ N(0, 0.01), biases 0 (classifier is also a Conv1d).
    k1, k2, k3 = jax.random.split(key, 3)
    w1 = 0.01 * jax.random.normal(k1, (C, C // GROUPS, K), jnp.float32)   # PyTorch (Cout, Cin/g, K)
    w2 = 0.01 * jax.random.normal(k2, (C, C // GROUPS, K), jnp.float32)
    wc = 0.01 * jax.random.normal(k3, (NC2, C // GROUPS, 1), jnp.float32)
    b1 = jnp.zeros((C,), jnp.float32)
    b2 = jnp.zeros((C,), jnp.float32)
    bc = jnp.zeros((NC2,), jnp.float32)
    return w1, b1, w2, b2, wc, bc


def per_tap_dense_weights(w_pt):
    """(Cout, Cin/groups, K) grouped conv weight -> (K, Cin, Cout) dense block-diagonal per-tap stack."""
    w_np = np.asarray(w_pt)
    cout, cin_g, k = w_np.shape
    cin = cin_g * GROUPS
    cout_g = cout // GROUPS
    wd = np.zeros((k, cin, cout), np.float32)
    for g in range(GROUPS):
        blk = w_np[g * cout_g:(g + 1) * cout_g]              # (cout_g, cin_g, K)
        blk = np.transpose(blk, (2, 1, 0))                   # (K, cin_g, cout_g)
        wd[:, g * cin_g:(g + 1) * cin_g, g * cout_g:(g + 1) * cout_g] = blk
    return jnp.asarray(wd)


def fused_output_weight(wc_pt, bc):
    """Identity passthrough (C lanes) + grouped 1x1 classifier (NC2 lanes), zero-padded to CLS_PAD."""
    wc_np = np.asarray(wc_pt)
    cout, cin_g, _ = wc_np.shape
    cin = cin_g * GROUPS
    cout_g = cout // GROUPS
    wf = np.zeros((cin, CLS_PAD), np.float32)
    wf[:cin, :cin] = np.eye(cin, dtype=np.float32)           # x2 passthrough -> lanes 0..C-1
    for g in range(GROUPS):
        blk = wc_np[g * cout_g:(g + 1) * cout_g, :, 0].T     # (cin_g, cout_g)
        wf[g * cin_g:(g + 1) * cin_g, cin + g * cout_g:cin + (g + 1) * cout_g] = blk
    bf = np.zeros((1, CLS_PAD), np.float32)
    bf[0, cin:cin + cout] = np.asarray(bc)
    return jnp.asarray(wf), jnp.asarray(bf)


# ----------------------------- pure-JAX reference (NCW, mirrors PyTorch) -----------------------------
def ref_forward(inputs_btc, w1, b1, w2, b2, wc, bc):
    x = jnp.transpose(inputs_btc, (0, 2, 1))  # (B, C, T)  == inputs.permute([0,2,1])

    def conv(xin, w, b, pad):
        y = lax.conv_general_dilated(
            xin, w, window_strides=(1,), padding=((pad, pad),), rhs_dilation=(DIL,),
            dimension_numbers=("NCH", "OIH", "NCH"), feature_group_count=GROUPS)
        return y + b[None, :, None]

    h1 = conv(x, w1, b1, PAD)
    x1 = _leaky(h1) + x
    h2 = conv(x1, w2, b2, PAD)
    x2 = _leaky(h2) + x1
    cls = conv(x2, wc, bc, 0)
    x2 = jnp.transpose(x2, (0, 2, 1))
    cls = jnp.transpose(cls, (0, 2, 1))
    return (x2[:, :, 1024:], cls[:, :, NCLS:], x2[:, :, :1024], cls[:, :, :NCLS])


# ----------------------------- main -----------------------------
if __name__ == "__main__":
    key = jax.random.PRNGKey(0)
    kx, kp = jax.random.split(key)
    inputs = jax.random.normal(kx, (B, T, C), jnp.float32)   # module input: (B, T, n_feature)

    w1, b1, w2, b2, wc, bc = make_params(kp)
    w1taps = per_tap_dense_weights(w1)
    w2taps = per_tap_dense_weights(w2)
    wf, bf = fused_output_weight(wc, bc)

    outs = model_forward_pallas(inputs, w1taps, b1, w2taps, b2, wf, bf)
    outs = jax.block_until_ready(outs)

    refs = ref_forward(inputs, w1, b1, w2, b2, wc, bc)
    for o, r in zip(outs, refs):
        assert o.shape == r.shape, (o.shape, r.shape)
        if o.size:
            np.testing.assert_allclose(np.asarray(o), np.asarray(r), rtol=1e-5, atol=1e-5)

    print("KERNEL_OK")
</pallas_src>

<mosaic_0001>
module attributes {stable_mosaic.version = 11 : i64} {
  func.func @model_kernel(%arg0: i32, %arg1: memref<32x64xf32, #tpu.memory_space<vmem>>, %arg2: memref<3x64x64xf32, #tpu.memory_space<vmem>>, %arg3: memref<1x64xf32, #tpu.memory_space<vmem>>, %arg4: memref<3x64x64xf32, #tpu.memory_space<vmem>>, %arg5: memref<1x64xf32, #tpu.memory_space<vmem>>, %arg6: memref<64x128xf32, #tpu.memory_space<vmem>>, %arg7: memref<1x128xf32, #tpu.memory_space<vmem>>, %arg8: memref<32x128xf32, #tpu.memory_space<vmem>>) attributes {dimension_semantics = [#tpu.dimension_semantics<arbitrary>], iteration_bounds = array<i64: 1>, scalar_prefetch = 0 : i64, scratch_operands = 0 : i64, tpu.core_type = #tpu.core_type<tc>, window_params = [{pipeline_mode = #tpu.pipeline_mode<synchronous>, transform_indices = @transform_0, window_bounds = array<i64: 32, 64>}, {pipeline_mode = #tpu.pipeline_mode<synchronous>, transform_indices = @transform_1, window_bounds = array<i64: 3, 64, 64>}, {pipeline_mode = #tpu.pipeline_mode<synchronous>, transform_indices = @transform_2, window_bounds = array<i64: 1, 64>}, {pipeline_mode = #tpu.pipeline_mode<synchronous>, transform_indices = @transform_3, window_bounds = array<i64: 3, 64, 64>}, {pipeline_mode = #tpu.pipeline_mode<synchronous>, transform_indices = @transform_4, window_bounds = array<i64: 1, 64>}, {pipeline_mode = #tpu.pipeline_mode<synchronous>, transform_indices = @transform_5, window_bounds = array<i64: 64, 128>}, {pipeline_mode = #tpu.pipeline_mode<synchronous>, transform_indices = @transform_6, window_bounds = array<i64: 1, 128>}, {pipeline_mode = #tpu.pipeline_mode<synchronous>, transform_indices = @transform_7, window_bounds = array<i64: 32, 128>}]} {
    %c0 = arith.constant 0 : index
    %c0_0 = arith.constant 0 : index
    %0 = vector.load %arg1[%c0, %c0_0] : memref<32x64xf32, #tpu.memory_space<vmem>>, vector<32x64xf32>
    %1 = tpu.iota {dimensions = array<i32: 0>} : vector<32x1xi32>
    %c15_i32 = arith.constant 15 : i32
    %2 = vector.broadcast %c15_i32 : i32 to vector<32x1xi32>
    %3 = arith.andi %1, %2 : vector<32x1xi32>
    %c1_i32 = arith.constant 1 : i32
    %4 = vector.broadcast %c1_i32 : i32 to vector<32x1xi32>
    %5 = arith.cmpi sge, %3, %4 : vector<32x1xi32>
    %c15_i32_1 = arith.constant 15 : i32
    %6 = vector.broadcast %c15_i32_1 : i32 to vector<32x1xi32>
    %7 = arith.cmpi slt, %3, %6 : vector<32x1xi32>
    %c1_i32_2 = arith.constant 1 : i32
    %8 = tpu.dynamic_rotate %0 by %c1_i32_2 dim 0 : vector<32x64xf32>, i32 -> vector<32x64xf32>
    %cst = arith.constant 0.000000e+00 : f32
    %9 = vector.shape_cast %5 : vector<32x1xi1> to vector<32x1xi1>
    %10 = vector.broadcast %9 : vector<32x1xi1> to vector<32x64xi1>
    %11 = vector.broadcast %cst : f32 to vector<32x64xf32>
    %12 = arith.select %10, %8, %11 : vector<32x64xi1>, vector<32x64xf32>
    %c31_i32 = arith.constant 31 : i32
    %13 = tpu.dynamic_rotate %0 by %c31_i32 dim 0 : vector<32x64xf32>, i32 -> vector<32x64xf32>
    %cst_3 = arith.constant 0.000000e+00 : f32
    %14 = vector.shape_cast %7 : vector<32x1xi1> to vector<32x1xi1>
    %15 = vector.broadcast %14 : vector<32x1xi1> to vector<32x64xi1>
    %16 = vector.broadcast %cst_3 : f32 to vector<32x64xf32>
    %17 = arith.select %15, %13, %16 : vector<32x64xi1>, vector<32x64xf32>
    %c0_4 = arith.constant 0 : index
    %c0_5 = arith.constant 0 : index
    %c0_6 = arith.constant 0 : index
    %18 = vector.load %arg2[%c0_4, %c0_5, %c0_6] : memref<3x64x64xf32, #tpu.memory_space<vmem>>, vector<1x64x64xf32>
    %19 = vector.shape_cast %18 : vector<1x64x64xf32> to vector<64x64xf32>
    %cst_7 = arith.constant dense<0.000000e+00> : vector<32x64xf32>
    %20 = tpu.matmul %12, %19, %cst_7 {dimension_numbers = #tpu.dot_dimension_numbers<[1], [0], [0], [1], [0, 0, 1, 1], [], []>} : vector<32x64xf32>, vector<64x64xf32>, vector<32x64xf32> -> vector<32x64xf32>
    %c1 = arith.constant 1 : index
    %c0_8 = arith.constant 0 : index
    %c0_9 = arith.constant 0 : index
    %21 = vector.load %arg2[%c1, %c0_8, %c0_9] : memref<3x64x64xf32, #tpu.memory_space<vmem>>, vector<1x64x64xf32>
    %22 = vector.shape_cast %21 : vector<1x64x64xf32> to vector<64x64xf32>
    %cst_10 = arith.constant dense<0.000000e+00> : vector<32x64xf32>
    %23 = tpu.matmul %0, %22, %cst_10 {dimension_numbers = #tpu.dot_dimension_numbers<[1], [0], [0], [1], [0, 0, 1, 1], [], []>} : vector<32x64xf32>, vector<64x64xf32>, vector<32x64xf32> -> vector<32x64xf32>
    %24 = arith.addf %20, %23 : vector<32x64xf32>
    %c2 = arith.constant 2 : index
    %c0_11 = arith.constant 0 : index
    %c0_12 = arith.constant 0 : index
    %25 = vector.load %arg2[%c2, %c0_11, %c0_12] : memref<3x64x64xf32, #tpu.memory_space<vmem>>, vector<1x64x64xf32>
    %26 = vector.shape_cast %25 : vector<1x64x64xf32> to vector<64x64xf32>
    %cst_13 = arith.constant dense<0.000000e+00> : vector<32x64xf32>
    %27 = tpu.matmul %17, %26, %cst_13 {dimension_numbers = #tpu.dot_dimension_numbers<[1], [0], [0], [1], [0, 0, 1, 1], [], []>} : vector<32x64xf32>, vector<64x64xf32>, vector<32x64xf32> -> vector<32x64xf32>
    %28 = arith.addf %24, %27 : vector<32x64xf32>
    %c0_14 = arith.constant 0 : index
    %c0_15 = arith.constant 0 : index
    %29 = vector.load %arg3[%c0_14, %c0_15] : memref<1x64xf32, #tpu.memory_space<vmem>>, vector<1x64xf32>
    %30 = vector.broadcast %29 : vector<1x64xf32> to vector<32x64xf32>
    %31 = arith.addf %28, %30 : vector<32x64xf32>
    %cst_16 = arith.constant 0.000000e+00 : f32
    %32 = vector.broadcast %cst_16 : f32 to vector<32x64xf32>
    %33 = arith.cmpf ogt, %31, %32 : vector<32x64xf32>
    %cst_17 = arith.constant 2.000000e-01 : f32
    %34 = vector.broadcast %cst_17 : f32 to vector<32x64xf32>
    %35 = arith.mulf %34, %31 : vector<32x64xf32>
    %36 = arith.select %33, %31, %35 : vector<32x64xi1>, vector<32x64xf32>
    %37 = arith.addf %36, %0 : vector<32x64xf32>
    %c1_i32_18 = arith.constant 1 : i32
    %38 = tpu.dynamic_rotate %37 by %c1_i32_18 dim 0 : vector<32x64xf32>, i32 -> vector<32x64xf32>
    %cst_19 = arith.constant 0.000000e+00 : f32
    %39 = vector.shape_cast %5 : vector<32x1xi1> to vector<32x1xi1>
    %40 = vector.broadcast %39 : vector<32x1xi1> to vector<32x64xi1>
    %41 = vector.broadcast %cst_19 : f32 to vector<32x64xf32>
    %42 = arith.select %40, %38, %41 : vector<32x64xi1>, vector<32x64xf32>
    %c31_i32_20 = arith.constant 31 : i32
    %43 = tpu.dynamic_rotate %37 by %c31_i32_20 dim 0 : vector<32x64xf32>, i32 -> vector<32x64xf32>
    %cst_21 = arith.constant 0.000000e+00 : f32
    %44 = vector.shape_cast %7 : vector<32x1xi1> to vector<32x1xi1>
    %45 = vector.broadcast %44 : vector<32x1xi1> to vector<32x64xi1>
    %46 = vector.broadcast %cst_21 : f32 to vector<32x64xf32>
    %47 = arith.select %45, %43, %46 : vector<32x64xi1>, vector<32x64xf32>
    %c0_22 = arith.constant 0 : index
    %c0_23 = arith.constant 0 : index
    %c0_24 = arith.constant 0 : index
    %48 = vector.load %arg4[%c0_22, %c0_23, %c0_24] : memref<3x64x64xf32, #tpu.memory_space<vmem>>, vector<1x64x64xf32>
    %49 = vector.shape_cast %48 : vector<1x64x64xf32> to vector<64x64xf32>
    %cst_25 = arith.constant dense<0.000000e+00> : vector<32x64xf32>
    %50 = tpu.matmul %42, %49, %cst_25 {dimension_numbers = #tpu.dot_dimension_numbers<[1], [0], [0], [1], [0, 0, 1, 1], [], []>} : vector<32x64xf32>, vector<64x64xf32>, vector<32x64xf32> -> vector<32x64xf32>
    %c1_26 = arith.constant 1 : index
    %c0_27 = arith.constant 0 : index
    %c0_28 = arith.constant 0 : index
    %51 = vector.load %arg4[%c1_26, %c0_27, %c0_28] : memref<3x64x64xf32, #tpu.memory_space<vmem>>, vector<1x64x64xf32>
    %52 = vector.shape_cast %51 : vector<1x64x64xf32> to vector<64x64xf32>
    %cst_29 = arith.constant dense<0.000000e+00> : vector<32x64xf32>
    %53 = tpu.matmul %37, %52, %cst_29 {dimension_numbers = #tpu.dot_dimension_numbers<[1], [0], [0], [1], [0, 0, 1, 1], [], []>} : vector<32x64xf32>, vector<64x64xf32>, vector<32x64xf32> -> vector<32x64xf32>
    %54 = arith.addf %50, %53 : vector<32x64xf32>
    %c2_30 = arith.constant 2 : index
    %c0_31 = arith.constant 0 : index
    %c0_32 = arith.constant 0 : index
    %55 = vector.load %arg4[%c2_30, %c0_31, %c0_32] : memref<3x64x64xf32, #tpu.memory_space<vmem>>, vector<1x64x64xf32>
    %56 = vector.shape_cast %55 : vector<1x64x64xf32> to vector<64x64xf32>
    %cst_33 = arith.constant dense<0.000000e+00> : vector<32x64xf32>
    %57 = tpu.matmul %47, %56, %cst_33 {dimension_numbers = #tpu.dot_dimension_numbers<[1], [0], [0], [1], [0, 0, 1, 1], [], []>} : vector<32x64xf32>, vector<64x64xf32>, vector<32x64xf32> -> vector<32x64xf32>
    %58 = arith.addf %54, %57 : vector<32x64xf32>
    %c0_34 = arith.constant 0 : index
    %c0_35 = arith.constant 0 : index
    %59 = vector.load %arg5[%c0_34, %c0_35] : memref<1x64xf32, #tpu.memory_space<vmem>>, vector<1x64xf32>
    %60 = vector.broadcast %59 : vector<1x64xf32> to vector<32x64xf32>
    %61 = arith.addf %58, %60 : vector<32x64xf32>
    %cst_36 = arith.constant 0.000000e+00 : f32
    %62 = vector.broadcast %cst_36 : f32 to vector<32x64xf32>
    %63 = arith.cmpf ogt, %61, %62 : vector<32x64xf32>
    %cst_37 = arith.constant 2.000000e-01 : f32
    %64 = vector.broadcast %cst_37 : f32 to vector<32x64xf32>
    %65 = arith.mulf %64, %61 : vector<32x64xf32>
    %66 = arith.select %63, %61, %65 : vector<32x64xi1>, vector<32x64xf32>
    %67 = arith.addf %66, %37 : vector<32x64xf32>
    %c0_38 = arith.constant 0 : index
    %c0_39 = arith.constant 0 : index
    %68 = vector.load %arg6[%c0_38, %c0_39] : memref<64x128xf32, #tpu.memory_space<vmem>>, vector<64x128xf32>
    %cst_40 = arith.constant dense<0.000000e+00> : vector<32x128xf32>
    %69 = tpu.matmul %67, %68, %cst_40 {dimension_numbers = #tpu.dot_dimension_numbers<[1], [0], [0], [1], [0, 0, 1, 1], [], []>} : vector<32x64xf32>, vector<64x128xf32>, vector<32x128xf32> -> vector<32x128xf32>
    %c0_41 = arith.constant 0 : index
    %c0_42 = arith.constant 0 : index
    %70 = vector.load %arg7[%c0_41, %c0_42] : memref<1x128xf32, #tpu.memory_space<vmem>>, vector<1x128xf32>
    %71 = vector.broadcast %70 : vector<1x128xf32> to vector<32x128xf32>
    %72 = arith.addf %69, %71 : vector<32x128xf32>
    %c0_43 = arith.constant 0 : index
    %c0_44 = arith.constant 0 : index
    %73 = vector.load %arg8[%c0_43, %c0_44] : memref<32x128xf32, #tpu.memory_space<vmem>>, vector<32x128xf32>
    tpu.vector_store %arg8[%c0_43, %c0_44], %72 {strides = array<i32>} : memref<32x128xf32, #tpu.memory_space<vmem>>, vector<32x128xf32>,
    return
  }
  func.func @transform_0(%arg0: i32) -> (i32, i32) {
    %c0_i32 = arith.constant 0 : i32
    %c0_i32_0 = arith.constant 0 : i32
    %c0_i32_1 = arith.constant 0 : i32
    return %c0_i32, %c0_i32_0 : i32, i32
  }
  func.func @transform_1(%arg0: i32) -> (i32, i32, i32) {
    %c0_i32 = arith.constant 0 : i32
    %c0_i32_0 = arith.constant 0 : i32
    %c0_i32_1 = arith.constant 0 : i32
    %c0_i32_2 = arith.constant 0 : i32
    return %c0_i32, %c0_i32_0, %c0_i32_1 : i32, i32, i32
  }
  func.func @transform_2(%arg0: i32) -> (i32, i32) {
    %c0_i32 = arith.constant 0 : i32
    %c0_i32_0 = arith.constant 0 : i32
    %c0_i32_1 = arith.constant 0 : i32
    return %c0_i32, %c0_i32_0 : i32, i32
  }
  func.func @transform_3(%arg0: i32) -> (i32, i32, i32) {
    %c0_i32 = arith.constant 0 : i32
    %c0_i32_0 = arith.constant 0 : i32
    %c0_i32_1 = arith.constant 0 : i32
    %c0_i32_2 = arith.constant 0 : i32
    return %c0_i32, %c0_i32_0, %c0_i32_1 : i32, i32, i32
  }
  func.func @transform_4(%arg0: i32) -> (i32, i32) {
    %c0_i32 = arith.constant 0 : i32
    %c0_i32_0 = arith.constant 0 : i32
    %c0_i32_1 = arith.constant 0 : i32
    return %c0_i32, %c0_i32_0 : i32, i32
  }
  func.func @transform_5(%arg0: i32) -> (i32, i32) {
    %c0_i32 = arith.constant 0 : i32
    %c0_i32_0 = arith.constant 0 : i32
    %c0_i32_1 = arith.constant 0 : i32
    return %c0_i32, %c0_i32_0 : i32, i32
  }
  func.func @transform_6(%arg0: i32) -> (i32, i32) {
    %c0_i32 = arith.constant 0 : i32
    %c0_i32_0 = arith.constant 0 : i32
    %c0_i32_1 = arith.constant 0 : i32
    return %c0_i32, %c0_i32_0 : i32, i32
  }
  func.func @transform_7(%arg0: i32) -> (i32, i32) {
    %c0_i32 = arith.constant 0 : i32
    %c0_i32_0 = arith.constant 0 : i32
    %c0_i32_1 = arith.constant 0 : i32
    return %c0_i32, %c0_i32_0 : i32, i32
  }
}

</mosaic_0001>

<llo_original>
// kernel: tpu_custom_call.1
$region0: #{tpu_custom_call.1}
  #allocation0 [shape = 'u32[]', space=smem, size = 0x4, offset = 0x4, fixed_abs, tag = 'smem constant byte address 0x4 - core index']
  #allocation1 [shape = 'u32[144,128]{1,0:T(1,128)}', space=vmem, size = 0x12000, scoped, tag = 'internal scratch']
  %s0 = inlined_call_operand.hbm [shape: f32[32,64], index: 0, kind: input, shape index: {}]
  %s1 = inlined_call_operand.hbm [shape: f32[3,64,64], index: 1, kind: input, shape index: {}]
  %s2 = inlined_call_operand.vmem [shape: f32[1,64], index: 2, kind: input, shape index: {}]
  %s3 = inlined_call_operand.hbm [shape: f32[3,64,64], index: 3, kind: input, shape index: {}]
  %s4 = inlined_call_operand.vmem [shape: f32[1,64], index: 4, kind: input, shape index: {}]
  %s5 = inlined_call_operand.hbm [shape: f32[64,128], index: 5, kind: input, shape index: {}]
  %s6 = inlined_call_operand.vmem [shape: f32[1,128], index: 6, kind: input, shape index: {}]
  %s7 = inlined_call_operand.hbm [shape: f32[32,128], index: 7, kind: output, shape index: {}]
  %s8 = sld [smem:[#allocation0]]
  $region54: #{tpu_custom_call.1} parent=0
    _
  %s10 = ssub.s32 1, %s8
  %s11 = scalar_select 0, %s10, %s8
  $region1: #{tpu_custom_call.1} parent=0
    #allocation2 [shape = 'u8[16384]{0}', space=vmem, size = 0x4000, scoped, tag = 'input window, operand 0, single buffered']
    #allocation3 [shape = 's32[1]{0}', space=sflag, size = 0x4, scoped, tag = 'scoped memory for tpu_custom_call.1']
    #allocation4 [shape = 's32[1]{0}', space=sflag, size = 0x4, scoped, tag = 'scoped memory for tpu_custom_call.1']
    #allocation5 [shape = 'u8[98304]{0}', space=vmem, size = 0x18000, scoped, tag = 'input window, operand 1, single buffered']
    #allocation6 [shape = 's32[1]{0}', space=sflag, size = 0x4, scoped, tag = 'scoped memory for tpu_custom_call.1']
    #allocation7 [shape = 'u8[98304]{0}', space=vmem, size = 0x18000, scoped, tag = 'input window, operand 3, single buffered']
    #allocation8 [shape = 'u8[32768]{0}', space=vmem, size = 0x8000, scoped, tag = 'input window, operand 5, single buffered']
    #allocation9 [shape = 's32[1]{0}', space=sflag, size = 0x4, scoped, tag = 'scoped memory for tpu_custom_call.1']
    #allocation10 [shape = 'u8[16384]{0}', space=vmem, size = 0x4000, scoped, tag = 'output window, operand 0, single buffered']
    %12 = vsyncpa [#allocation3], 0
    %13 = vsyncpa [#allocation6], 0
    %14 = vsyncpa [#allocation9], 0
    %15 = vsyncpa [#allocation4], 0
    // Predicated region
    $region2: #{tpu_custom_call.1} parent=1 // pred_check
      _
    $region3: #{tpu_custom_call.1} parent=1 // pred_check_branch
      %17 = sbr.rel (0) target = $region5
    $region4: #{tpu_custom_call.1} parent=1 // pred_region
      %s19 = ssub.s32 512, 512
      %20 = vsyncadd [#allocation3], %s19
      %s21 = sshll.u32 [#allocation2], 4
      %s22 = int_to_ptr.vmem [resolvable:$true] %s21
      %27 = dma.hbm_to_vmem [thread:$0]  %s0, 512, %s22, [#allocation3], 128, 128, 8
    $region5: #{tpu_custom_call.1} parent=1 // pred_fallthru
      _
    // Predicated region
    $region6: #{tpu_custom_call.1} parent=1 // pred_check
      _
    $region7: #{tpu_custom_call.1} parent=1 // pred_check_branch
      %29 = sbr.rel (0) target = $region9
    $region8: #{tpu_custom_call.1} parent=1 // pred_region
      %s31 = ssub.s32 3072, 3072
      %32 = vsyncadd [#allocation6], %s31
      %s33 = sshll.u32 [#allocation5], 4
      %s34 = int_to_ptr.vmem [resolvable:$true] %s33
      %39 = dma.hbm_to_vmem [thread:$0]  %s1, 3072, %s34, [#allocation6], 128, 128, 8
    $region9: #{tpu_custom_call.1} parent=1 // pred_fallthru
      _
    // Predicated region
    $region10: #{tpu_custom_call.1} parent=1 // pred_check
      _
    $region11: #{tpu_custom_call.1} parent=1 // pred_check_branch
      %41 = sbr.rel (0) target = $region13
    $region12: #{tpu_custom_call.1} parent=1 // pred_region
      _
    $region13: #{tpu_custom_call.1} parent=1 // pred_fallthru
      _
    // Predicated region
    $region14: #{tpu_custom_call.1} parent=1 // pred_check
      _
    $region15: #{tpu_custom_call.1} parent=1 // pred_check_branch
      %43 = sbr.rel (0) target = $region17
    $region16: #{tpu_custom_call.1} parent=1 // pred_region
      %s45 = ssub.s32 3072, 3072
      %46 = vsyncadd [#allocation6], %s45
      %s47 = sshll.u32 [#allocation7], 4
      %s48 = int_to_ptr.vmem [resolvable:$true] %s47
      %53 = dma.hbm_to_vmem [thread:$0]  %s3, 3072, %s48, [#allocation6], 128, 128, 8
    $region17: #{tpu_custom_call.1} parent=1 // pred_fallthru
      _
    // Predicated region
    $region18: #{tpu_custom_call.1} parent=1 // pred_check
      _
    $region19: #{tpu_custom_call.1} parent=1 // pred_check_branch
      %55 = sbr.rel (0) target = $region21
    $region20: #{tpu_custom_call.1} parent=1 // pred_region
      _
    $region21: #{tpu_custom_call.1} parent=1 // pred_fallthru
      _
    // Predicated region
    $region22: #{tpu_custom_call.1} parent=1 // pred_check
      _
    $region23: #{tpu_custom_call.1} parent=1 // pred_check_branch
      %57 = sbr.rel (0) target = $region25
    $region24: #{tpu_custom_call.1} parent=1 // pred_region
      %s59 = ssub.s32 1024, 1024
      %60 = vsyncadd [#allocation9], %s59
      %s61 = sshll.u32 [#allocation8], 4
      %s62 = int_to_ptr.vmem [resolvable:$true] %s61
      %67 = dma.hbm_to_vmem [thread:$0]  %s5, 1024, %s62, [#allocation9], 128, 128, 8
    $region25: #{tpu_custom_call.1} parent=1 // pred_fallthru
      _
    // Predicated region
    $region26: #{tpu_custom_call.1} parent=1 // pred_check
      _
    $region27: #{tpu_custom_call.1} parent=1 // pred_check_branch
      %69 = sbr.rel (0) target = $region29
    $region28: #{tpu_custom_call.1} parent=1 // pred_region
      _
    $region29: #{tpu_custom_call.1} parent=1 // pred_fallthru
      _
    // Predicated region
    $region30: #{tpu_custom_call.1} parent=1 // pred_check
      _
    $region31: #{tpu_custom_call.1} parent=1 // pred_check_branch
      %71 = sbr.rel (0) target = $region33
    $region32: #{tpu_custom_call.1} parent=1 // pred_region
      %72 = dma.done [#allocation3], 512
    $region33: #{tpu_custom_call.1} parent=1 // pred_fallthru
      _
    // Predicated region
    $region34: #{tpu_custom_call.1} parent=1 // pred_check
      _
    $region35: #{tpu_custom_call.1} parent=1 // pred_check_branch
      %74 = sbr.rel (0) target = $region37
    $region36: #{tpu_custom_call.1} parent=1 // pred_region
      %75 = dma.done [#allocation6], 3072
    $region37: #{tpu_custom_call.1} parent=1 // pred_fallthru
      _
    // Predicated region
    $region38: #{tpu_custom_call.1} parent=1 // pred_check
      _
    $region39: #{tpu_custom_call.1} parent=1 // pred_check_branch
      %77 = sbr.rel (0) target = $region41
    $region40: #{tpu_custom_call.1} parent=1 // pred_region
      %78 = dma.done [#allocation6], 3072
    $region41: #{tpu_custom_call.1} parent=1 // pred_fallthru
      _
    // Predicated region
    $region42: #{tpu_custom_call.1} parent=1 // pred_check
      _
    $region43: #{tpu_custom_call.1} parent=1 // pred_check_branch
      %80 = sbr.rel (0) target = $region45
    $region44: #{tpu_custom_call.1} parent=1 // pred_region
      %81 = dma.done [#allocation9], 1024
    $region45: #{tpu_custom_call.1} parent=1 // pred_fallthru
      _
    %v82 = vld [vmem:[#allocation2] sm:$0xff]
    %v83 = vld [vmem:[#allocation2 + $0x8] sm:$0xff]
    %v84 = vld [vmem:[#allocation2 + $0x10] sm:$0xff]
    %v85 = vld [vmem:[#allocation2 + $0x18] sm:$0xff]
    %v86 = vlaneseq
    %v87 = vshrl.u32 %v86, 7
    %v88 = vadd.s32 %v87, 8
    %v89 = vadd.s32 %v87, 16
    %v90 = vadd.s32 %v87, 24
    %v91 = vand.u32 %v87, 15
    %v92 = vand.u32 %v88, 15
    %v93 = vand.u32 %v89, 15
    %v94 = vand.u32 %v90, 15
    %vm95 = vcmp.ge.s32.totalorder %v91, 1
    %vm96 = vcmp.ge.s32.totalorder %v92, 1
    %vm97 = vcmp.ge.s32.totalorder %v93, 1
    %vm98 = vcmp.ge.s32.totalorder %v94, 1
    %vm99 = vcmp.lt.s32.totalorder %v91, 15
    %vm100 = vcmp.lt.s32.totalorder %v92, 15
    %vm101 = vcmp.lt.s32.totalorder %v93, 15
    %vm102 = vcmp.lt.s32.totalorder %v94, 15
    %v103 = vrot.slane %v82, 7
    %v104 = vrot.slane %v83, 7
    %v105 = vrot.slane %v84, 7
    %v106 = vrot.slane %v85, 7
    %vm107 = vcmp.lt.s32.totalorder %v87, 1
    %v108 = vsel %vm107, %v105, %v106
    %v109 = vsel %vm107, %v104, %v105
    %v110 = vsel %vm107, %v103, %v104
    %v111 = vsel %vm107, %v106, %v103
    %v112 = vsel %vm95, 1, 0
    %v113 = vsel %vm96, 1, 0
    %v114 = vsel %vm97, 1, 0
    %v115 = vsel %vm98, 1, 0
    %vm116 = vcmp.eq.s32.totalorder %v112, 1
    %vm117 = vcmp.eq.s32.totalorder %v113, 1
    %vm118 = vcmp.eq.s32.totalorder %v114, 1
    %vm119 = vcmp.eq.s32.totalorder %v115, 1
    %v120 = vsel %vm116, %v111, 0.0
    %v121 = vsel %vm117, %v110, 0.0
    %v122 = vsel %vm118, %v109, 0.0
    %v123 = vsel %vm119, %v108, 0.0
    %v124 = vrot.slane %v82, 1
    %v125 = vrot.slane %v83, 1
    %v126 = vrot.slane %v84, 1
    %v127 = vrot.slane %v85, 1
    %vm128 = vcmp.lt.s32.totalorder %v87, 7
    %v129 = vsel %vm128, %v126, %v127
    %v130 = vsel %vm128, %v125, %v126
    %v131 = vsel %vm128, %v124, %v125
    %v132 = vsel %vm128, %v127, %v124
    %v133 = vsel %vm99, 1, 0
    %v134 = vsel %vm100, 1, 0
    %v135 = vsel %vm101, 1, 0
    %v136 = vsel %vm102, 1, 0
    %vm137 = vcmp.eq.s32.totalorder %v133, 1
    %vm138 = vcmp.eq.s32.totalorder %v134, 1
    %vm139 = vcmp.eq.s32.totalorder %v135, 1
    %vm140 = vcmp.eq.s32.totalorder %v136, 1
    %v141 = vsel %vm137, %v131, 0.0
    %v142 = vsel %vm138, %v130, 0.0
    %v143 = vsel %vm139, %v129, 0.0
    %v144 = vsel %vm140, %v132, 0.0
    %v145 = vld [vmem:[#allocation5] sm:$0xff]
    %v146 = vld [vmem:[#allocation5 + $0x8] sm:$0xff]
    %v147 = vld [vmem:[#allocation5 + $0x10] sm:$0xff]
    %v148 = vld [vmem:[#allocation5 + $0x18] sm:$0xff]
    %v149 = vld [vmem:[#allocation5 + $0x20] sm:$0xff]
    %v150 = vld [vmem:[#allocation5 + $0x28] sm:$0xff]
    %v151 = vld [vmem:[#allocation5 + $0x30] sm:$0xff]
    %v152 = vld [vmem:[#allocation5 + $0x38] sm:$0xff]
    %s153 = scalar_lea.vmem [#allocation5], 64
    %v154 = vld [vmem:[%s153] sm:$0xff]
    %v155 = vld [vmem:[%s153 + $0x8] sm:$0xff]
    %v156 = vld [vmem:[%s153 + $0x10] sm:$0xff]
    %v157 = vld [vmem:[%s153 + $0x18] sm:$0xff]
    %v158 = vld [vmem:[%s153 + $0x20] sm:$0xff]
    %v159 = vld [vmem:[%s153 + $0x28] sm:$0xff]
    %v160 = vld [vmem:[%s153 + $0x30] sm:$0xff]
    %v161 = vld [vmem:[%s153 + $0x38] sm:$0xff]
    %vm162 = vcmask 523264
    %v164 = vsel %vm162, %v82, 0
    %v167 = vsel %vm162, %v83, 0
    %v170 = vsel %vm162, %v84, 0
    %v173 = vsel %vm162, %v85, 0
    %175 = vmatprep.subr.mxu0 0.0
    %176 = vmatpush1.msra.mxu0 %v154
    %177 = vmatprep.subr.mxu0 0.0
    %178 = vmatpush1.msra.mxu0 %v155
    %179 = vmatprep.subr.mxu0 0.0
    %180 = vmatpush1.msra.mxu0 %v156
    %181 = vmatprep.subr.mxu0 0.0
    %182 = vmatpush1.msra.mxu0 %v157
    %183 = vmatprep.subr.mxu0 0.0
    %184 = vmatpush1.msra.mxu0 %v158
    %185 = vmatprep.subr.mxu0 0.0
    %186 = vmatpush1.msra.mxu0 %v159
    %187 = vmatprep.subr.mxu0 0.0
    %188 = vmatpush1.msra.mxu0 %v160
    %189 = vmatprep.subr.mxu0 0.0
    %190 = vmatpush1.msra.mxu0 %v161
    %191 = vmatprep.subr.mxu0 0.0
    %192 = vmatpush1.msra.mxu0 0.0
    %193 = vmatprep.subr.mxu0 0.0
    %194 = vmatpush1.msra.mxu0 0.0
    %195 = vmatprep.subr.mxu0 0.0
    %196 = vmatpush1.msra.mxu0 0.0
    %197 = vmatprep.subr.mxu0 0.0
    %198 = vmatpush1.msra.mxu0 0.0
    %199 = vmatprep.subr.mxu0 0.0
    %200 = vmatpush1.msra.mxu0 0.0
    %201 = vmatprep.subr.mxu0 0.0
    %202 = vmatpush1.msra.mxu0 0.0
    %203 = vmatprep.subr.mxu0 0.0
    %204 = vmatpush1.msra.mxu0 0.0
    %205 = vmatprep.subr.mxu0 0.0
    %206 = vmatpush1.msra.mxu0 0.0
    %207 = vmatprep.subr.mxu0 0.0
    %208 = vmatpush1.msra.mxu0 0.0
    %209 = vmatprep.subr.mxu0 0.0
    %210 = vmatpush1.msra.mxu0 0.0
    %211 = vmatprep.subr.mxu0 0.0
    %212 = vmatpush1.msra.mxu0 0.0
    %213 = vmatprep.subr.mxu0 0.0
    %214 = vmatpush1.msra.mxu0 0.0
    %215 = vmatprep.subr.mxu0 0.0
    %216 = vmatpush1.msra.mxu0 0.0
    %217 = vmatprep.subr.mxu0 0.0
    %218 = vmatpush1.msra.mxu0 0.0
    %219 = vmatprep.subr.mxu0 0.0
    %220 = vmatpush1.msra.mxu0 0.0
    %221 = vmatprep.subr.mxu0 0.0
    %222 = vmatpush1.msra.mxu0 0.0
    %223 = vmatprep.subr.mxu0 0.0
    %224 = vmatpush1.msra.mxu0 0.0
    %225 = vmatprep.subr.mxu0 0.0
    %226 = vmatpush1.msra.mxu0 0.0
    %227 = vmatprep.subr.mxu0 0.0
    %228 = vmatpush1.msra.mxu0 0.0
    %229 = vmatprep.subr.mxu0 0.0
    %230 = vmatpush1.msra.mxu0 0.0
    %231 = vmatprep.subr.mxu0 0.0
    %232 = vmatpush1.msra.mxu0 0.0
    %233 = vmatprep.subr.mxu0 0.0
    %234 = vmatpush1.msra.mxu0 0.0
    %235 = vmatprep.subr.mxu0 0.0
    %236 = vmatpush1.msra.mxu0 0.0
    %237 = vmatprep.subr.mxu0 0.0
    %238 = vmatpush1.msra.mxu0 0.0
    %239 = vmatprep.mubr.f32.mxu0 0.0
    %240 = vmatmul.mubr.f32.gmra.mrb[0].mxu0 %v164
    %v241 = vpop.f32.mrb[0].mxu0
    %v242 = vadd.f32 0.0, %v241
    %v243 = vpop.f32.mrb[0].mxu0
    %244 = vmatprep.mubr.f32.mxu0 0.0
    %245 = vmatmul.mubr.f32.gmra.mrb[0].mxu0 %v167
    %v246 = vpop.f32.mrb[0].mxu0
    %v247 = vadd.f32 0.0, %v246
    %v248 = vpop.f32.mrb[0].mxu0
    %249 = vmatprep.mubr.f32.mxu0 0.0
    %250 = vmatmul.mubr.f32.gmra.mrb[0].mxu0 %v170
    %v251 = vpop.f32.mrb[0].mxu0
    %v252 = vadd.f32 0.0, %v251
    %v253 = vpop.f32.mrb[0].mxu0
    %254 = vmatprep.mubr.f32.mxu0 0.0
    %255 = vmatmul.mubr.f32.gmra.mrb[0].mxu0 %v173
    %v256 = vpop.f32.mrb[0].mxu0
    %v257 = vadd.f32 0.0, %v256
    %v258 = vpop.f32.mrb[0].mxu0
    %259 = vdwg.mxu0
    %v261 = vsel %vm162, %v120, 0
    %v264 = vsel %vm162, %v121, 0
    %v267 = vsel %vm162, %v122, 0
    %v270 = vsel %vm162, %v123, 0
    %272 = vmatprep.subr.mxu0 0.0
    %273 = vmatpush1.msra.mxu0 %v145
    %274 = vmatprep.subr.mxu0 0.0
    %275 = vmatpush1.msra.mxu0 %v146
    %276 = vmatprep.subr.mxu0 0.0
    %277 = vmatpush1.msra.mxu0 %v147
    %278 = vmatprep.subr.mxu0 0.0
    %279 = vmatpush1.msra.mxu0 %v148
    %280 = vmatprep.subr.mxu0 0.0
    %281 = vmatpush1.msra.mxu0 %v149
    %282 = vmatprep.subr.mxu0 0.0
    %283 = vmatpush1.msra.mxu0 %v150
    %284 = vmatprep.subr.mxu0 0.0
    %285 = vmatpush1.msra.mxu0 %v151
    %286 = vmatprep.subr.mxu0 0.0
    %287 = vmatpush1.msra.mxu0 %v152
    %288 = vmatprep.subr.mxu0 0.0
    %289 = vmatpush1.msra.mxu0 0.0
    %290 = vmatprep.subr.mxu0 0.0
    %291 = vmatpush1.msra.mxu0 0.0
    %292 = vmatprep.subr.mxu0 0.0
    %293 = vmatpush1.msra.mxu0 0.0
    %294 = vmatprep.subr.mxu0 0.0
    %295 = vmatpush1.msra.mxu0 0.0
    %296 = vmatprep.subr.mxu0 0.0
    %297 = vmatpush1.msra.mxu0 0.0
    %298 = vmatprep.subr.mxu0 0.0
    %299 = vmatpush1.msra.mxu0 0.0
    %300 = vmatprep.subr.mxu0 0.0
    %301 = vmatpush1.msra.mxu0 0.0
    %302 = vmatprep.subr.mxu0 0.0
    %303 = vmatpush1.msra.mxu0 0.0
    %304 = vmatprep.subr.mxu0 0.0
    %305 = vmatpush1.msra.mxu0 0.0
    %306 = vmatprep.subr.mxu0 0.0
    %307 = vmatpush1.msra.mxu0 0.0
    %308 = vmatprep.subr.mxu0 0.0
    %309 = vmatpush1.msra.mxu0 0.0
    %310 = vmatprep.subr.mxu0 0.0
    %311 = vmatpush1.msra.mxu0 0.0
    %312 = vmatprep.subr.mxu0 0.0
    %313 = vmatpush1.msra.mxu0 0.0
    %314 = vmatprep.subr.mxu0 0.0
    %315 = vmatpush1.msra.mxu0 0.0
    %316 = vmatprep.subr.mxu0 0.0
    %317 = vmatpush1.msra.mxu0 0.0
    %318 = vmatprep.subr.mxu0 0.0
    %319 = vmatpush1.msra.mxu0 0.0
    %320 = vmatprep.subr.mxu0 0.0
    %321 = vmatpush1.msra.mxu0 0.0
    %322 = vmatprep.subr.mxu0 0.0
    %323 = vmatpush1.msra.mxu0 0.0
    %324 = vmatprep.subr.mxu0 0.0
    %325 = vmatpush1.msra.mxu0 0.0
    %326 = vmatprep.subr.mxu0 0.0
    %327 = vmatpush1.msra.mxu0 0.0
    %328 = vmatprep.subr.mxu0 0.0
    %329 = vmatpush1.msra.mxu0 0.0
    %330 = vmatprep.subr.mxu0 0.0
    %331 = vmatpush1.msra.mxu0 0.0
    %332 = vmatprep.subr.mxu0 0.0
    %333 = vmatpush1.msra.mxu0 0.0
    %334 = vmatprep.subr.mxu0 0.0
    %335 = vmatpush1.msra.mxu0 0.0
    %336 = vmatprep.mubr.f32.mxu0 0.0
    %337 = vmatmul.mubr.f32.gmra.mrb[0].mxu0 %v261
    %v338 = vpop.f32.mrb[0].mxu0
    %v339 = vadd.f32 %v242, %v338
    %v340 = vpop.f32.mrb[0].mxu0
    %341 = vmatprep.mubr.f32.mxu0 0.0
    %342 = vmatmul.mubr.f32.gmra.mrb[0].mxu0 %v264
    %v343 = vpop.f32.mrb[0].mxu0
    %v344 = vadd.f32 %v247, %v343
    %v345 = vpop.f32.mrb[0].mxu0
    %346 = vmatprep.mubr.f32.mxu0 0.0
    %347 = vmatmul.mubr.f32.gmra.mrb[0].mxu0 %v267
    %v348 = vpop.f32.mrb[0].mxu0
    %v349 = vadd.f32 %v252, %v348
    %v350 = vpop.f32.mrb[0].mxu0
    %351 = vmatprep.mubr.f32.mxu0 0.0
    %352 = vmatmul.mubr.f32.gmra.mrb[0].mxu0 %v270
    %v353 = vpop.f32.mrb[0].mxu0
    %v354 = vadd.f32 %v257, %v353
    %v355 = vpop.f32.mrb[0].mxu0
    %356 = vdwg.mxu0
    %s357 = scalar_lea.vmem [#allocation5], 128
    %v358 = vld [vmem:[%s357] sm:$0xff]
    %v359 = vld [vmem:[%s357 + $0x8] sm:$0xff]
    %v360 = vld [vmem:[%s357 + $0x10] sm:$0xff]
    %v361 = vld [vmem:[%s357 + $0x18] sm:$0xff]
    %v362 = vld [vmem:[%s357 + $0x20] sm:$0xff]
    %v363 = vld [vmem:[%s357 + $0x28] sm:$0xff]
    %v364 = vld [vmem:[%s357 + $0x30] sm:$0xff]
    %v365 = vld [vmem:[%s357 + $0x38] sm:$0xff]
    %v367 = vsel %vm162, %v141, 0
    %v370 = vsel %vm162, %v142, 0
    %v373 = vsel %vm162, %v143, 0
    %v376 = vsel %vm162, %v144, 0
    %378 = vmatprep.subr.mxu0 0.0
    %379 = vmatpush1.msra.mxu0 %v358
    %380 = vmatprep.subr.mxu0 0.0
    %381 = vmatpush1.msra.mxu0 %v359
    %382 = vmatprep.subr.mxu0 0.0
    %383 = vmatpush1.msra.mxu0 %v360
    %384 = vmatprep.subr.mxu0 0.0
    %385 = vmatpush1.msra.mxu0 %v361
    %386 = vmatprep.subr.mxu0 0.0
    %387 = vmatpush1.msra.mxu0 %v362
    %388 = vmatprep.subr.mxu0 0.0
    %389 = vmatpush1.msra.mxu0 %v363
    %390 = vmatprep.subr.mxu0 0.0
    %391 = vmatpush1.msra.mxu0 %v364
    %392 = vmatprep.subr.mxu0 0.0
    %393 = vmatpush1.msra.mxu0 %v365
    %394 = vmatprep.subr.mxu0 0.0
    %395 = vmatpush1.msra.mxu0 0.0
    %396 = vmatprep.subr.mxu0 0.0
    %397 = vmatpush1.msra.mxu0 0.0
    %398 = vmatprep.subr.mxu0 0.0
    %399 = vmatpush1.msra.mxu0 0.0
    %400 = vmatprep.subr.mxu0 0.0
    %401 = vmatpush1.msra.mxu0 0.0
    %402 = vmatprep.subr.mxu0 0.0
    %403 = vmatpush1.msra.mxu0 0.0
    %404 = vmatprep.subr.mxu0 0.0
    %405 = vmatpush1.msra.mxu0 0.0
    %406 = vmatprep.subr.mxu0 0.0
    %407 = vmatpush1.msra.mxu0 0.0
    %408 = vmatprep.subr.mxu0 0.0
    %409 = vmatpush1.msra.mxu0 0.0
    %410 = vmatprep.subr.mxu0 0.0
    %411 = vmatpush1.msra.mxu0 0.0
    %412 = vmatprep.subr.mxu0 0.0
    %413 = vmatpush1.msra.mxu0 0.0
    %414 = vmatprep.subr.mxu0 0.0
    %415 = vmatpush1.msra.mxu0 0.0
    %416 = vmatprep.subr.mxu0 0.0
    %417 = vmatpush1.msra.mxu0 0.0
    %418 = vmatprep.subr.mxu0 0.0
    %419 = vmatpush1.msra.mxu0 0.0
    %420 = vmatprep.subr.mxu0 0.0
    %421 = vmatpush1.msra.mxu0 0.0
    %422 = vmatprep.subr.mxu0 0.0
    %423 = vmatpush1.msra.mxu0 0.0
    %424 = vmatprep.subr.mxu0 0.0
    %425 = vmatpush1.msra.mxu0 0.0
    %426 = vmatprep.subr.mxu0 0.0
    %427 = vmatpush1.msra.mxu0 0.0
    %428 = vmatprep.subr.mxu0 0.0
    %429 = vmatpush1.msra.mxu0 0.0
    %430 = vmatprep.subr.mxu0 0.0
    %431 = vmatpush1.msra.mxu0 0.0
    %432 = vmatprep.subr.mxu0 0.0
    %433 = vmatpush1.msra.mxu0 0.0
    %434 = vmatprep.subr.mxu0 0.0
    %435 = vmatpush1.msra.mxu0 0.0
    %436 = vmatprep.subr.mxu0 0.0
    %437 = vmatpush1.msra.mxu0 0.0
    %438 = vmatprep.subr.mxu0 0.0
    %439 = vmatpush1.msra.mxu0 0.0
    %440 = vmatprep.subr.mxu0 0.0
    %441 = vmatpush1.msra.mxu0 0.0
    %442 = vmatprep.mubr.f32.mxu0 0.0
    %443 = vmatmul.mubr.f32.gmra.mrb[0].mxu0 %v367
    %v444 = vpop.f32.mrb[0].mxu0
    %v445 = vadd.f32 0.0, %v444
    %v446 = vpop.f32.mrb[0].mxu0
    %447 = vmatprep.mubr.f32.mxu0 0.0
    %448 = vmatmul.mubr.f32.gmra.mrb[0].mxu0 %v370
    %v449 = vpop.f32.mrb[0].mxu0
    %v450 = vadd.f32 0.0, %v449
    %v451 = vpop.f32.mrb[0].mxu0
    %452 = vmatprep.mubr.f32.mxu0 0.0
    %453 = vmatmul.mubr.f32.gmra.mrb[0].mxu0 %v373
    %v454 = vpop.f32.mrb[0].mxu0
    %v455 = vadd.f32 0.0, %v454
    %v456 = vpop.f32.mrb[0].mxu0
    %457 = vmatprep.mubr.f32.mxu0 0.0
    %458 = vmatmul.mubr.f32.gmra.mrb[0].mxu0 %v376
    %v459 = vpop.f32.mrb[0].mxu0
    %v460 = vadd.f32 0.0, %v459
    %v461 = vpop.f32.mrb[0].mxu0
    %462 = vdwg.mxu0
    %v463 = vadd.f32 %v339, %v445
    %v464 = vadd.f32 %v344, %v450
    %v465 = vadd.f32 %v349, %v455
    %v466 = vadd.f32 %v354, %v460
    %v467 = vld [vmem:[%s2] sm:$0x1]
    %v469 = vlaneseq
    %v470 = vshrl.u32 %v469, 7
    %v471 = vsub.s32 0, %v470
    %v472 = vrot.slane %v467, %v471
    %v474 = vadd.f32 %v463, %v472
    %v475 = vadd.f32 %v464, %v472
    %v476 = vadd.f32 %v465, %v472
    %v477 = vadd.f32 %v466, %v472
    %vm478 = vcmp.gt.f32.partialorder %v474, 0.0
    %vm479 = vcmp.gt.f32.partialorder %v475, 0.0
    %vm480 = vcmp.gt.f32.partialorder %v476, 0.0
    %vm481 = vcmp.gt.f32.partialorder %v477, 0.0
    %v482 = vmul.f32 %v474, 0.2
    %v483 = vmul.f32 %v475, 0.2
    %v484 = vmul.f32 %v476, 0.2
    %v485 = vmul.f32 %v477, 0.2
    %v486 = vsel %vm478, %v474, %v482
    %v487 = vsel %vm479, %v475, %v483
    %v488 = vsel %vm480, %v476, %v484
    %v489 = vsel %vm481, %v477, %v485
    %v490 = vadd.f32 %v486, %v82
    %v491 = vadd.f32 %v487, %v83
    %v492 = vadd.f32 %v488, %v84
    %v493 = vadd.f32 %v489, %v85
    %v494 = vrot.slane %v490, 7
    %v495 = vrot.slane %v491, 7
    %v496 = vrot.slane %v492, 7
    %v497 = vrot.slane %v493, 7
    %v498 = vsel %vm107, %v496, %v497
    %v499 = vsel %vm107, %v495, %v496
    %v500 = vsel %vm107, %v494, %v495
    %v501 = vsel %vm107, %v497, %v494
    %v502 = vsel %vm116, %v501, 0.0
    %v503 = vsel %vm117, %v500, 0.0
    %v504 = vsel %vm118, %v499, 0.0
    %v505 = vsel %vm119, %v498, 0.0
    %v506 = vrot.slane %v490, 1
    %v507 = vrot.slane %v491, 1
    %v508 = vrot.slane %v492, 1
    %v509 = vrot.slane %v493, 1
    %v510 = vsel %vm128, %v508, %v509
    %v511 = vsel %vm128, %v507, %v508
    %v512 = vsel %vm128, %v506, %v507
    %v513 = vsel %vm128, %v509, %v506
    %v514 = vsel %vm137, %v512, 0.0
    %v515 = vsel %vm138, %v511, 0.0
    %v516 = vsel %vm139, %v510, 0.0
    %v517 = vsel %vm140, %v513, 0.0
    %v518 = vld [vmem:[#allocation7] sm:$0xff]
    %v519 = vld [vmem:[#allocation7 + $0x8] sm:$0xff]
    %v520 = vld [vmem:[#allocation7 + $0x10] sm:$0xff]
    %v521 = vld [vmem:[#allocation7 + $0x18] sm:$0xff]
    %v522 = vld [vmem:[#allocation7 + $0x20] sm:$0xff]
    %v523 = vld [vmem:[#allocation7 + $0x28] sm:$0xff]
    %v524 = vld [vmem:[#allocation7 + $0x30] sm:$0xff]
    %v525 = vld [vmem:[#allocation7 + $0x38] sm:$0xff]
    %s526 = scalar_lea.vmem [#allocation7], 64
    %v527 = vld [vmem:[%s526] sm:$0xff]
    %v528 = vld [vmem:[%s526 + $0x8] sm:$0xff]
    %v529 = vld [vmem:[%s526 + $0x10] sm:$0xff]
    %v530 = vld [vmem:[%s526 + $0x18] sm:$0xff]
    %v531 = vld [vmem:[%s526 + $0x20] sm:$0xff]
    %v532 = vld [vmem:[%s526 + $0x28] sm:$0xff]
    %v533 = vld [vmem:[%s526 + $0x30] sm:$0xff]
    %v534 = vld [vmem:[%s526 + $0x38] sm:$0xff]
    %v536 = vsel %vm162, %v490, 0
    %v539 = vsel %vm162, %v491, 0
    %v542 = vsel %vm162, %v492, 0
    %v545 = vsel %vm162, %v493, 0
    %547 = vmatprep.subr.mxu0 0.0
    %548 = vmatpush1.msra.mxu0 %v527
    %549 = vmatprep.subr.mxu0 0.0
    %550 = vmatpush1.msra.mxu0 %v528
    %551 = vmatprep.subr.mxu0 0.0
    %552 = vmatpush1.msra.mxu0 %v529
    %553 = vmatprep.subr.mxu0 0.0
    %554 = vmatpush1.msra.mxu0 %v530
    %555 = vmatprep.subr.mxu0 0.0
    %556 = vmatpush1.msra.mxu0 %v531
    %557 = vmatprep.subr.mxu0 0.0
    %558 = vmatpush1.msra.mxu0 %v532
    %559 = vmatprep.subr.mxu0 0.0
    %560 = vmatpush1.msra.mxu0 %v533
    %561 = vmatprep.subr.mxu0 0.0
    %562 = vmatpush1.msra.mxu0 %v534
    %563 = vmatprep.subr.mxu0 0.0
    %564 = vmatpush1.msra.mxu0 0.0
    %565 = vmatprep.subr.mxu0 0.0
    %566 = vmatpush1.msra.mxu0 0.0
    %567 = vmatprep.subr.mxu0 0.0
    %568 = vmatpush1.msra.mxu0 0.0
    %569 = vmatprep.subr.mxu0 0.0
    %570 = vmatpush1.msra.mxu0 0.0
    %571 = vmatprep.subr.mxu0 0.0
    %572 = vmatpush1.msra.mxu0 0.0
    %573 = vmatprep.subr.mxu0 0.0
    %574 = vmatpush1.msra.mxu0 0.0
    %575 = vmatprep.subr.mxu0 0.0
    %576 = vmatpush1.msra.mxu0 0.0
    %577 = vmatprep.subr.mxu0 0.0
    %578 = vmatpush1.msra.mxu0 0.0
    %579 = vmatprep.subr.mxu0 0.0
    %580 = vmatpush1.msra.mxu0 0.0
    %581 = vmatprep.subr.mxu0 0.0
    %582 = vmatpush1.msra.mxu0 0.0
    %583 = vmatprep.subr.mxu0 0.0
    %584 = vmatpush1.msra.mxu0 0.0
    %585 = vmatprep.subr.mxu0 0.0
    %586 = vmatpush1.msra.mxu0 0.0
    %587 = vmatprep.subr.mxu0 0.0
    %588 = vmatpush1.msra.mxu0 0.0
    %589 = vmatprep.subr.mxu0 0.0
    %590 = vmatpush1.msra.mxu0 0.0
    %591 = vmatprep.subr.mxu0 0.0
    %592 = vmatpush1.msra.mxu0 0.0
    %593 = vmatprep.subr.mxu0 0.0
    %594 = vmatpush1.msra.mxu0 0.0
    %595 = vmatprep.subr.mxu0 0.0
    %596 = vmatpush1.msra.mxu0 0.0
    %597 = vmatprep.subr.mxu0 0.0
    %598 = vmatpush1.msra.mxu0 0.0
    %599 = vmatprep.subr.mxu0 0.0
    %600 = vmatpush1.msra.mxu0 0.0
    %601 = vmatprep.subr.mxu0 0.0
    %602 = vmatpush1.msra.mxu0 0.0
    %603 = vmatprep.subr.mxu0 0.0
    %604 = vmatpush1.msra.mxu0 0.0
    %605 = vmatprep.subr.mxu0 0.0
    %606 = vmatpush1.msra.mxu0 0.0
    %607 = vmatprep.subr.mxu0 0.0
    %608 = vmatpush1.msra.mxu0 0.0
    %609 = vmatprep.subr.mxu0 0.0
    %610 = vmatpush1.msra.mxu0 0.0
    %611 = vmatprep.mubr.f32.mxu0 0.0
    %612 = vmatmul.mubr.f32.gmra.mrb[0].mxu0 %v536
    %v613 = vpop.f32.mrb[0].mxu0
    %v614 = vadd.f32 0.0, %v613
    %v615 = vpop.f32.mrb[0].mxu0
    %616 = vmatprep.mubr.f32.mxu0 0.0
    %617 = vmatmul.mubr.f32.gmra.mrb[0].mxu0 %v539
    %v618 = vpop.f32.mrb[0].mxu0
    %v619 = vadd.f32 0.0, %v618
    %v620 = vpop.f32.mrb[0].mxu0
    %621 = vmatprep.mubr.f32.mxu0 0.0
    %622 = vmatmul.mubr.f32.gmra.mrb[0].mxu0 %v542
    %v623 = vpop.f32.mrb[0].mxu0
    %v624 = vadd.f32 0.0, %v623
    %v625 = vpop.f32.mrb[0].mxu0
    %626 = vmatprep.mubr.f32.mxu0 0.0
    %627 = vmatmul.mubr.f32.gmra.mrb[0].mxu0 %v545
    %v628 = vpop.f32.mrb[0].mxu0
    %v629 = vadd.f32 0.0, %v628
    %v630 = vpop.f32.mrb[0].mxu0
    %631 = vdwg.mxu0
    %v633 = vsel %vm162, %v502, 0
    %v636 = vsel %vm162, %v503, 0
    %v639 = vsel %vm162, %v504, 0
    %v642 = vsel %vm162, %v505, 0
    %644 = vmatprep.subr.mxu0 0.0
    %645 = vmatpush1.msra.mxu0 %v518
    %646 = vmatprep.subr.mxu0 0.0
    %647 = vmatpush1.msra.mxu0 %v519
    %648 = vmatprep.subr.mxu0 0.0
    %649 = vmatpush1.msra.mxu0 %v520
    %650 = vmatprep.subr.mxu0 0.0
    %651 = vmatpush1.msra.mxu0 %v521
    %652 = vmatprep.subr.mxu0 0.0
    %653 = vmatpush1.msra.mxu0 %v522
    %654 = vmatprep.subr.mxu0 0.0
    %655 = vmatpush1.msra.mxu0 %v523
    %656 = vmatprep.subr.mxu0 0.0
    %657 = vmatpush1.msra.mxu0 %v524
    %658 = vmatprep.subr.mxu0 0.0
    %659 = vmatpush1.msra.mxu0 %v525
    %660 = vmatprep.subr.mxu0 0.0
    %661 = vmatpush1.msra.mxu0 0.0
    %662 = vmatprep.subr.mxu0 0.0
    %663 = vmatpush1.msra.mxu0 0.0
    %664 = vmatprep.subr.mxu0 0.0
    %665 = vmatpush1.msra.mxu0 0.0
    %666 = vmatprep.subr.mxu0 0.0
    %667 = vmatpush1.msra.mxu0 0.0
    %668 = vmatprep.subr.mxu0 0.0
    %669 = vmatpush1.msra.mxu0 0.0
    %670 = vmatprep.subr.mxu0 0.0
    %671 = vmatpush1.msra.mxu0 0.0
    %672 = vmatprep.subr.mxu0 0.0
    %673 = vmatpush1.msra.mxu0 0.0
    %674 = vmatprep.subr.mxu0 0.0
    %675 = vmatpush1.msra.mxu0 0.0
    %676 = vmatprep.subr.mxu0 0.0
    %677 = vmatpush1.msra.mxu0 0.0
    %678 = vmatprep.subr.mxu0 0.0
    %679 = vmatpush1.msra.mxu0 0.0
    %680 = vmatprep.subr.mxu0 0.0
    %681 = vmatpush1.msra.mxu0 0.0
    %682 = vmatprep.subr.mxu0 0.0
    %683 = vmatpush1.msra.mxu0 0.0
    %684 = vmatprep.subr.mxu0 0.0
    %685 = vmatpush1.msra.mxu0 0.0
    %686 = vmatprep.subr.mxu0 0.0
    %687 = vmatpush1.msra.mxu0 0.0
    %688 = vmatprep.subr.mxu0 0.0
    %689 = vmatpush1.msra.mxu0 0.0
    %690 = vmatprep.subr.mxu0 0.0
    %691 = vmatpush1.msra.mxu0 0.0
    %692 = vmatprep.subr.mxu0 0.0
    %693 = vmatpush1.msra.mxu0 0.0
    %694 = vmatprep.subr.mxu0 0.0
    %695 = vmatpush1.msra.mxu0 0.0
    %696 = vmatprep.subr.mxu0 0.0
    %697 = vmatpush1.msra.mxu0 0.0
    %698 = vmatprep.subr.mxu0 0.0
    %699 = vmatpush1.msra.mxu0 0.0
    %700 = vmatprep.subr.mxu0 0.0
    %701 = vmatpush1.msra.mxu0 0.0
    %702 = vmatprep.subr.mxu0 0.0
    %703 = vmatpush1.msra.mxu0 0.0
    %704 = vmatprep.subr.mxu0 0.0
    %705 = vmatpush1.msra.mxu0 0.0
    %706 = vmatprep.subr.mxu0 0.0
    %707 = vmatpush1.msra.mxu0 0.0
    %708 = vmatprep.mubr.f32.mxu0 0.0
    %709 = vmatmul.mubr.f32.gmra.mrb[0].mxu0 %v633
    %v710 = vpop.f32.mrb[0].mxu0
    %v711 = vadd.f32 %v614, %v710
    %v712 = vpop.f32.mrb[0].mxu0
    %713 = vmatprep.mubr.f32.mxu0 0.0
    %714 = vmatmul.mubr.f32.gmra.mrb[0].mxu0 %v636
    %v715 = vpop.f32.mrb[0].mxu0
    %v716 = vadd.f32 %v619, %v715
    %v717 = vpop.f32.mrb[0].mxu0
    %718 = vmatprep.mubr.f32.mxu0 0.0
    %719 = vmatmul.mubr.f32.gmra.mrb[0].mxu0 %v639
    %v720 = vpop.f32.mrb[0].mxu0
    %v721 = vadd.f32 %v624, %v720
    %v722 = vpop.f32.mrb[0].mxu0
    %723 = vmatprep.mubr.f32.mxu0 0.0
    %724 = vmatmul.mubr.f32.gmra.mrb[0].mxu0 %v642
    %v725 = vpop.f32.mrb[0].mxu0
    %v726 = vadd.f32 %v629, %v725
    %v727 = vpop.f32.mrb[0].mxu0
    %728 = vdwg.mxu0
    %s729 = scalar_lea.vmem [#allocation7], 128
    %v730 = vld [vmem:[%s729] sm:$0xff]
    %v731 = vld [vmem:[%s729 + $0x8] sm:$0xff]
    %v732 = vld [vmem:[%s729 + $0x10] sm:$0xff]
    %v733 = vld [vmem:[%s729 + $0x18] sm:$0xff]
    %v734 = vld [vmem:[%s729 + $0x20] sm:$0xff]
    %v735 = vld [vmem:[%s729 + $0x28] sm:$0xff]
    %v736 = vld [vmem:[%s729 + $0x30] sm:$0xff]
    %v737 = vld [vmem:[%s729 + $0x38] sm:$0xff]
    %v739 = vsel %vm162, %v514, 0
    %v742 = vsel %vm162, %v515, 0
    %v745 = vsel %vm162, %v516, 0
    %v748 = vsel %vm162, %v517, 0
    %750 = vmatprep.subr.mxu0 0.0
    %751 = vmatpush1.msra.mxu0 %v730
    %752 = vmatprep.subr.mxu0 0.0
    %753 = vmatpush1.msra.mxu0 %v731
    %754 = vmatprep.subr.mxu0 0.0
    %755 = vmatpush1.msra.mxu0 %v732
    %756 = vmatprep.subr.mxu0 0.0
    %757 = vmatpush1.msra.mxu0 %v733
    %758 = vmatprep.subr.mxu0 0.0
    %759 = vmatpush1.msra.mxu0 %v734
    %760 = vmatprep.subr.mxu0 0.0
    %761 = vmatpush1.msra.mxu0 %v735
    %762 = vmatprep.subr.mxu0 0.0
    %763 = vmatpush1.msra.mxu0 %v736
    %764 = vmatprep.subr.mxu0 0.0
    %765 = vmatpush1.msra.mxu0 %v737
    %766 = vmatprep.subr.mxu0 0.0
    %767 = vmatpush1.msra.mxu0 0.0
    %768 = vmatprep.subr.mxu0 0.0
    %769 = vmatpush1.msra.mxu0 0.0
    %770 = vmatprep.subr.mxu0 0.0
    %771 = vmatpush1.msra.mxu0 0.0
    %772 = vmatprep.subr.mxu0 0.0
    %773 = vmatpush1.msra.mxu0 0.0
    %774 = vmatprep.subr.mxu0 0.0
    %775 = vmatpush1.msra.mxu0 0.0
    %776 = vmatprep.subr.mxu0 0.0
    %777 = vmatpush1.msra.mxu0 0.0
    %778 = vmatprep.subr.mxu0 0.0
    %779 = vmatpush1.msra.mxu0 0.0
    %780 = vmatprep.subr.mxu0 0.0
    %781 = vmatpush1.msra.mxu0 0.0
    %782 = vmatprep.subr.mxu0 0.0
    %783 = vmatpush1.msra.mxu0 0.0
    %784 = vmatprep.subr.mxu0 0.0
    %785 = vmatpush1.msra.mxu0 0.0
    %786 = vmatprep.subr.mxu0 0.0
    %787 = vmatpush1.msra.mxu0 0.0
    %788 = vmatprep.subr.mxu0 0.0
    %789 = vmatpush1.msra.mxu0 0.0
    %790 = vmatprep.subr.mxu0 0.0
    %791 = vmatpush1.msra.mxu0 0.0
    %792 = vmatprep.subr.mxu0 0.0
    %793 = vmatpush1.msra.mxu0 0.0
    %794 = vmatprep.subr.mxu0 0.0
    %795 = vmatpush1.msra.mxu0 0.0
    %796 = vmatprep.subr.mxu0 0.0
    %797 = vmatpush1.msra.mxu0 0.0
    %798 = vmatprep.subr.mxu0 0.0
    %799 = vmatpush1.msra.mxu0 0.0
    %800 = vmatprep.subr.mxu0 0.0
    %801 = vmatpush1.msra.mxu0 0.0
    %802 = vmatprep.subr.mxu0 0.0
    %803 = vmatpush1.msra.mxu0 0.0
    %804 = vmatprep.subr.mxu0 0.0
    %805 = vmatpush1.msra.mxu0 0.0
    %806 = vmatprep.subr.mxu0 0.0
    %807 = vmatpush1.msra.mxu0 0.0
    %808 = vmatprep.subr.mxu0 0.0
    %809 = vmatpush1.msra.mxu0 0.0
    %810 = vmatprep.subr.mxu0 0.0
    %811 = vmatpush1.msra.mxu0 0.0
    %812 = vmatprep.subr.mxu0 0.0
    %813 = vmatpush1.msra.mxu0 0.0
    %814 = vmatprep.mubr.f32.mxu0 0.0
    %815 = vmatmul.mubr.f32.gmra.mrb[0].mxu0 %v739
    %v816 = vpop.f32.mrb[0].mxu0
    %v817 = vadd.f32 0.0, %v816
    %v818 = vpop.f32.mrb[0].mxu0
    %819 = vmatprep.mubr.f32.mxu0 0.0
    %820 = vmatmul.mubr.f32.gmra.mrb[0].mxu0 %v742
    %v821 = vpop.f32.mrb[0].mxu0
    %v822 = vadd.f32 0.0, %v821
    %v823 = vpop.f32.mrb[0].mxu0
    %824 = vmatprep.mubr.f32.mxu0 0.0
    %825 = vmatmul.mubr.f32.gmra.mrb[0].mxu0 %v745
    %v826 = vpop.f32.mrb[0].mxu0
    %v827 = vadd.f32 0.0, %v826
    %v828 = vpop.f32.mrb[0].mxu0
    %829 = vmatprep.mubr.f32.mxu0 0.0
    %830 = vmatmul.mubr.f32.gmra.mrb[0].mxu0 %v748
    %v831 = vpop.f32.mrb[0].mxu0
    %v832 = vadd.f32 0.0, %v831
    %v833 = vpop.f32.mrb[0].mxu0
    %834 = vdwg.mxu0
    %v835 = vadd.f32 %v711, %v817
    %v836 = vadd.f32 %v716, %v822
    %v837 = vadd.f32 %v721, %v827
    %v838 = vadd.f32 %v726, %v832
    %v839 = vld [vmem:[%s4] sm:$0x1]
    %v841 = vlaneseq
    %v842 = vshrl.u32 %v841, 7
    %v843 = vsub.s32 0, %v842
    %v844 = vrot.slane %v839, %v843
    %v846 = vadd.f32 %v835, %v844
    %v847 = vadd.f32 %v836, %v844
    %v848 = vadd.f32 %v837, %v844
    %v849 = vadd.f32 %v838, %v844
    %vm850 = vcmp.gt.f32.partialorder %v846, 0.0
    %vm851 = vcmp.gt.f32.partialorder %v847, 0.0
    %vm852 = vcmp.gt.f32.partialorder %v848, 0.0
    %vm853 = vcmp.gt.f32.partialorder %v849, 0.0
    %v854 = vmul.f32 %v846, 0.2
    %v855 = vmul.f32 %v847, 0.2
    %v856 = vmul.f32 %v848, 0.2
    %v857 = vmul.f32 %v849, 0.2
    %v858 = vsel %vm850, %v846, %v854
    %v859 = vsel %vm851, %v847, %v855
    %v860 = vsel %vm852, %v848, %v856
    %v861 = vsel %vm853, %v849, %v857
    %v862 = vadd.f32 %v858, %v490
    %v863 = vadd.f32 %v859, %v491
    %v864 = vadd.f32 %v860, %v492
    %v865 = vadd.f32 %v861, %v493
    %v866 = vld [vmem:[#allocation8] sm:$0xff]
    %v867 = vld [vmem:[#allocation8 + $0x8] sm:$0xff]
    %v868 = vld [vmem:[#allocation8 + $0x10] sm:$0xff]
    %v869 = vld [vmem:[#allocation8 + $0x18] sm:$0xff]
    %v870 = vld [vmem:[#allocation8 + $0x20] sm:$0xff]
    %v871 = vld [vmem:[#allocation8 + $0x28] sm:$0xff]
    %v872 = vld [vmem:[#allocation8 + $0x30] sm:$0xff]
    %v873 = vld [vmem:[#allocation8 + $0x38] sm:$0xff]
    %v874 = vld [vmem:[%s6] sm:$0x1]
    %v876 = vlaneseq
    %v877 = vshrl.u32 %v876, 7
    %v878 = vsub.s32 0, %v877
    %v879 = vrot.slane %v874, %v878
    %v882 = vsel %vm162, %v862, 0
    %v885 = vsel %vm162, %v863, 0
    %v888 = vsel %vm162, %v864, 0
    %v891 = vsel %vm162, %v865, 0
    %893 = vmatprep.subr.mxu0 0.0
    %894 = vmatpush1.msra.mxu0 %v866
    %895 = vmatprep.subr.mxu0 0.0
    %896 = vmatpush1.msra.mxu0 %v867
    %897 = vmatprep.subr.mxu0 0.0
    %898 = vmatpush1.msra.mxu0 %v868
    %899 = vmatprep.subr.mxu0 0.0
    %900 = vmatpush1.msra.mxu0 %v869
    %901 = vmatprep.subr.mxu0 0.0
    %902 = vmatpush1.msra.mxu0 %v870
    %903 = vmatprep.subr.mxu0 0.0
    %904 = vmatpush1.msra.mxu0 %v871
    %905 = vmatprep.subr.mxu0 0.0
    %906 = vmatpush1.msra.mxu0 %v872
    %907 = vmatprep.subr.mxu0 0.0
    %908 = vmatpush1.msra.mxu0 %v873
    %909 = vmatprep.subr.mxu0 0.0
    %910 = vmatpush1.msra.mxu0 0.0
    %911 = vmatprep.subr.mxu0 0.0
    %912 = vmatpush1.msra.mxu0 0.0
    %913 = vmatprep.subr.mxu0 0.0
    %914 = vmatpush1.msra.mxu0 0.0
    %915 = vmatprep.subr.mxu0 0.0
    %916 = vmatpush1.msra.mxu0 0.0
    %917 = vmatprep.subr.mxu0 0.0
    %918 = vmatpush1.msra.mxu0 0.0
    %919 = vmatprep.subr.mxu0 0.0
    %920 = vmatpush1.msra.mxu0 0.0
    %921 = vmatprep.subr.mxu0 0.0
    %922 = vmatpush1.msra.mxu0 0.0
    %923 = vmatprep.subr.mxu0 0.0
    %924 = vmatpush1.msra.mxu0 0.0
    %925 = vmatprep.subr.mxu0 0.0
    %926 = vmatpush1.msra.mxu0 0.0
    %927 = vmatprep.subr.mxu0 0.0
    %928 = vmatpush1.msra.mxu0 0.0
    %929 = vmatprep.subr.mxu0 0.0
    %930 = vmatpush1.msra.mxu0 0.0
    %931 = vmatprep.subr.mxu0 0.0
    %932 = vmatpush1.msra.mxu0 0.0
    %933 = vmatprep.subr.mxu0 0.0
    %934 = vmatpush1.msra.mxu0 0.0
    %935 = vmatprep.subr.mxu0 0.0
    %936 = vmatpush1.msra.mxu0 0.0
    %937 = vmatprep.subr.mxu0 0.0
    %938 = vmatpush1.msra.mxu0 0.0
    %939 = vmatprep.subr.mxu0 0.0
    %940 = vmatpush1.msra.mxu0 0.0
    %941 = vmatprep.subr.mxu0 0.0
    %942 = vmatpush1.msra.mxu0 0.0
    %943 = vmatprep.subr.mxu0 0.0
    %944 = vmatpush1.msra.mxu0 0.0
    %945 = vmatprep.subr.mxu0 0.0
    %946 = vmatpush1.msra.mxu0 0.0
    %947 = vmatprep.subr.mxu0 0.0
    %948 = vmatpush1.msra.mxu0 0.0
    %949 = vmatprep.subr.mxu0 0.0
    %950 = vmatpush1.msra.mxu0 0.0
    %951 = vmatprep.subr.mxu0 0.0
    %952 = vmatpush1.msra.mxu0 0.0
    %953 = vmatprep.subr.mxu0 0.0
    %954 = vmatpush1.msra.mxu0 0.0
    %955 = vmatprep.subr.mxu0 0.0
    %956 = vmatpush1.msra.mxu0 0.0
    %957 = vmatprep.mubr.f32.mxu0 0.0
    %958 = vmatmul.mubr.f32.gmra.mrb[0].mxu0 %v882
    %v959 = vpop.f32.mrb[0].mxu0
    %v960 = vadd.f32 %v879, %v959
    %v961 = vpop.f32.mrb[0].mxu0
    %962 = vmatprep.mubr.f32.mxu0 0.0
    %963 = vmatmul.mubr.f32.gmra.mrb[0].mxu0 %v885
    %v964 = vpop.f32.mrb[0].mxu0
    %v965 = vadd.f32 %v879, %v964
    %v966 = vpop.f32.mrb[0].mxu0
    %967 = vmatprep.mubr.f32.mxu0 0.0
    %968 = vmatmul.mubr.f32.gmra.mrb[0].mxu0 %v888
    %v969 = vpop.f32.mrb[0].mxu0
    %v970 = vadd.f32 %v879, %v969
    %v971 = vpop.f32.mrb[0].mxu0
    %972 = vmatprep.mubr.f32.mxu0 0.0
    %973 = vmatmul.mubr.f32.gmra.mrb[0].mxu0 %v891
    %v974 = vpop.f32.mrb[0].mxu0
    %v975 = vadd.f32 %v879, %v974
    %v976 = vpop.f32.mrb[0].mxu0
    %977 = vdwg.mxu0
    %978 = vst [vmem:[#allocation10] sm:$0xff] %v960
    %979 = vst [vmem:[#allocation10 + $0x8] sm:$0xff] %v965
    %980 = vst [vmem:[#allocation10 + $0x10] sm:$0xff] %v970
    %981 = vst [vmem:[#allocation10 + $0x18] sm:$0xff] %v975
    // Predicated region
    $region46: #{tpu_custom_call.1} parent=1 // pred_check
      _
    $region47: #{tpu_custom_call.1} parent=1 // pred_check_branch
      %983 = sbr.rel (0) target = $region49
    $region48: #{tpu_custom_call.1} parent=1 // pred_region
      %s985 = ssub.s32 512, 512
      %986 = vsyncadd [#allocation4], %s985
      %s987 = sshll.u32 [#allocation10], 4
      %s988 = int_to_ptr.vmem [resolvable:$true] %s987
      %993 = dma.vmem_to_hbm [thread:$0]  %s988, 512, %s7, [#allocation4], 128, 128, 8
    $region49: #{tpu_custom_call.1} parent=1 // pred_fallthru
      _
    // Predicated region
    $region50: #{tpu_custom_call.1} parent=1 // pred_check
      _
    $region51: #{tpu_custom_call.1} parent=1 // pred_check_branch
      %995 = sbr.rel (0) target = $region53
    $region52: #{tpu_custom_call.1} parent=1 // pred_region
      %996 = dma.done [#allocation4], 512
    $region53: #{tpu_custom_call.1} parent=1 // pred_fallthru
      _
    %997 = vsyncpa [#allocation3], 1
    %998 = vsyncpa [#allocation6], 1
    %999 = vsyncpa [#allocation9], 1
    %1000 = vsyncpa [#allocation4], 1

</llo_original>
